<compile_context>
chip_gen: v5e
topology: v5e:2x2
jax: 0.10.0
libtpu: 0.0.40
codegen_flags: <defaults>
</compile_context>

<pallas_src>
import functools
import math

import jax
import jax.numpy as jnp
from jax import lax
from jax.experimental import pallas as pl
from jax.experimental.pallas import tpu as pltpu


def _input_layer_kernel(ids_ref, w_hbm, pos_ref, seg_ref, *rest,
                        scale, drop_p, use_dropout, block_rows):
    # ids_ref: (B*S,) int32 in SMEM (scalar prefetch)
    # w_hbm:   (V, D) embedding table, left in HBM (memory_space=pl.ANY)
    # pos_ref: (block_rows, D) positional rows, constant across grid steps
    # seg_ref: (block_rows, D) segment-embedding rows for this block
    # rest:    [u_ref] o_ref gather_buf sem
    if use_dropout:
        u_ref, o_ref, gbuf, sem = rest
    else:
        o_ref, gbuf, sem = rest
        u_ref = None

    r0 = pl.program_id(0) * block_rows

    # --- 1) Row gather: one HBM->VMEM DMA per token row, all in flight before
    #        the first wait (table never becomes VMEM-resident). ---
    def _start(r, carry):
        tok = ids_ref[r0 + r]                      # SMEM scalar read
        pltpu.make_async_copy(w_hbm.at[pl.ds(tok, 1)],
                              gbuf.at[pl.ds(r, 1)],
                              sem.at[0]).start()
        return carry

    lax.fori_loop(0, block_rows, _start, 0)

    def _wait(r, carry):
        # All copies have identical (1, D) shape, so waiting R times on the
        # shared semaphore drains exactly the issued transfers.
        pltpu.make_async_copy(w_hbm.at[pl.ds(0, 1)],
                              gbuf.at[pl.ds(0, 1)],
                              sem.at[0]).wait()
        return carry

    lax.fori_loop(0, block_rows, _wait, 0)

    # --- 2) Fused epilogue: scale in f32 post-gather (bf16-table safe), add
    #        positional + segment rows, dropout, lane-dense store. ---
    x = gbuf[...].astype(jnp.float32) * jnp.float32(scale)
    x = x + pos_ref[...].astype(jnp.float32)
    x = x + seg_ref[...].astype(jnp.float32)

    if use_dropout:
        # nn.Dropout semantics: drop with prob p, scale kept values by 1/(1-p).
        keep = u_ref[...] >= jnp.float32(drop_p)
        x = jnp.where(keep, x * jnp.float32(1.0 / (1.0 - drop_p)),
                      jnp.float32(0.0))

    o_ref[...] = x.astype(o_ref.dtype)


def input_layer_forward(token_ids, seg_embedding, embed_weight, pos_encoding,
                        *, d_model, dropout=0.0, train=False, rng_key=None,
                        block_batch=None):
    """Pallas equivalent of InputLayer.forward.

    token_ids:     (B, S) int token ids
    seg_embedding: (B, S, D) already-embedded segment vectors (the PyTorch
                   docstring says (B, S) of 0/1, but the module adds it
                   directly to a (B, S, D) tensor, so it must be (B, S, D))
    embed_weight:  (V, D) embedding table (f32 or bf16)
    pos_encoding:  (S, D)
    """
    B, S = token_ids.shape
    V, D = embed_weight.shape
    assert D == d_model and pos_encoding.shape == (S, D)
    assert seg_embedding.shape == (B, S, D)
    assert 0.0 <= dropout < 1.0

    # Rows per grid step: group whole sequences (so the (S, D) positional table
    # tiles cleanly), targeting ~256 rows per step for dense stores and few,
    # large grid steps.
    if block_batch is None:
        block_batch = max(1, min(B, 256 // max(S, 1)))
    block_batch = max(1, min(B, int(block_batch)))
    while B % block_batch:
        block_batch -= 1
    if (block_batch * S) % 8 != 0:                 # keep (8, 128)-aligned blocks
        block_batch = B
    R = block_batch * S                            # rows per grid step
    N = B * S                                      # total rows

    ids_flat = token_ids.reshape(N).astype(jnp.int32)
    seg_flat = seg_embedding.reshape(N, D)
    pos_block = jnp.tile(pos_encoding.astype(jnp.float32), (block_batch, 1))

    use_dropout = bool(train) and float(dropout) > 0.0

    kernel = functools.partial(
        _input_layer_kernel,
        scale=float(math.sqrt(d_model)),
        drop_p=float(dropout),
        use_dropout=use_dropout,
        block_rows=R)

    in_specs = [
        pl.BlockSpec(memory_space=pl.ANY),                 # embedding table (HBM)
        pl.BlockSpec((R, D), lambda i, ids: (0, 0)),       # positional rows (resident)
        pl.BlockSpec((R, D), lambda i, ids: (i, 0)),       # segment rows
    ]
    args = [ids_flat, embed_weight, pos_block, seg_flat]
    if use_dropout:
        if rng_key is None:
            rng_key = jax.random.PRNGKey(0)
        # Host-side uniforms instead of pltpu.prng_* (no interpret/CPU lowering).
        uniforms = jax.random.uniform(rng_key, (N, D), dtype=jnp.float32)
        in_specs.append(pl.BlockSpec((R, D), lambda i, ids: (i, 0)))
        args.append(uniforms)

    out_flat = pl.pallas_call(
        kernel,
        out_shape=jax.ShapeDtypeStruct((N, D), embed_weight.dtype),
        grid_spec=pltpu.PrefetchScalarGridSpec(
            num_scalar_prefetch=1,
            grid=(N // R,),
            in_specs=in_specs,
            out_specs=pl.BlockSpec((R, D), lambda i, ids: (i, 0)),
            scratch_shapes=[
                pltpu.VMEM((R, D), embed_weight.dtype),    # gathered rows
                pltpu.SemaphoreType.DMA((1,)),             # shared gather sem
            ]),
        compiler_params=pltpu.CompilerParams(
            dimension_semantics=("parallel",),
            vmem_limit_bytes=32 * 1024 * 1024),
    )(*args)

    return out_flat.reshape(B, S, D)


def make_positional_encoding(max_seq_len, d_model):
    """Same formula as PositionalEmbedding.__init__ (sin/cos of the SAME arg)."""
    pos = jnp.arange(max_seq_len, dtype=jnp.float32)[:, None]     # (S, 1)
    i = jnp.arange(d_model // 2, dtype=jnp.float32)[None, :]      # (1, D/2)
    arg = pos / jnp.power(10000.0, (2.0 * i) / d_model)           # (S, D/2)
    pe = jnp.zeros((max_seq_len, d_model), jnp.float32)
    pe = pe.at[:, 0::2].set(jnp.sin(arg))
    pe = pe.at[:, 1::2].set(jnp.cos(arg))
    return pe


def _reference(token_ids, seg_embedding, embed_weight, pos_encoding, d_model):
    x = embed_weight[token_ids].astype(jnp.float32)     # (B, S, D) gather
    x = x * math.sqrt(d_model)
    x = x + pos_encoding[None]
    x = x + seg_embedding
    return x                                            # dropout identity in eval


if __name__ == "__main__":
    # Small shapes consistent with the module: batch=4, max_seq_len=16,
    # d_model=128 (lane-dense), vocab=256.
    B, S, D, V = 4, 16, 128, 256
    drop_p = 0.1

    key = jax.random.PRNGKey(0)
    k_w, k_ids, k_seg, k_drop = jax.random.split(key, 4)
    embed_weight = jax.random.normal(k_w, (V, D), dtype=jnp.float32)
    token_ids = jax.random.randint(k_ids, (B, S), 0, V, dtype=jnp.int32)
    token_ids = token_ids.at[:, -2:].set(0)     # a few padding (idx 0) tokens
    seg_embedding = jax.random.normal(k_seg, (B, S, D), dtype=jnp.float32)
    pos_encoding = make_positional_encoding(S, D)

    ref = _reference(token_ids, seg_embedding, embed_weight, pos_encoding, D)

    # --- eval mode (dropout inactive): must match the reference ---
    # block_batch=2 -> 2 grid steps of 32 rows each (exercises the row gather
    # indexing across steps at toy sizes).
    out = input_layer_forward(token_ids, seg_embedding, embed_weight,
                              pos_encoding, d_model=D, dropout=drop_p,
                              train=False, block_batch=2)
    out = jax.block_until_ready(out)
    assert out.shape == (B, S, D)
    assert bool(jnp.allclose(out, ref, atol=1e-4, rtol=1e-4)), \
        float(jnp.max(jnp.abs(out - ref)))

    # --- train mode: exercise the fused dropout path ---
    out_tr = input_layer_forward(token_ids, seg_embedding, embed_weight,
                                 pos_encoding, d_model=D, dropout=drop_p,
                                 train=True, rng_key=k_drop, block_batch=2)
    out_tr = jax.block_until_ready(out_tr)
    assert out_tr.shape == (B, S, D)
    assert bool(jnp.all(jnp.isfinite(out_tr)))
    zero_frac = float(jnp.mean((out_tr == 0.0).astype(jnp.float32)))
    assert 0.02 < zero_frac < 0.30, zero_frac   # ~p of elements dropped
    # kept elements must equal reference / (1 - p)
    kept = out_tr != 0.0
    err = jnp.where(kept, jnp.abs(out_tr - ref / (1.0 - drop_p)), 0.0)
    assert bool(jnp.all(err < 1e-3)), float(jnp.max(err))

    print("KERNEL_OK")
</pallas_src>

<mosaic_0001>
module attributes {stable_mosaic.version = 11 : i64} {
  func.func @_input_layer_kernel(%arg0: i32, %arg1: memref<64xi32, #tpu.memory_space<smem>>, %arg2: memref<256x128xf32, #tpu.memory_space<any>>, %arg3: memref<32x128xf32, #tpu.memory_space<vmem>>, %arg4: memref<32x128xf32, #tpu.memory_space<vmem>>, %arg5: memref<32x128xf32, #tpu.memory_space<vmem>>, %arg6: memref<32x128xf32, #tpu.memory_space<vmem>>, %arg7: memref<1x!tpu.dma_semaphore, #tpu.memory_space<semaphore_mem>>) attributes {dimension_semantics = [#tpu.dimension_semantics<parallel>], iteration_bounds = array<i64: 2>, scalar_prefetch = 1 : i64, scratch_operands = 2 : i64, tpu.core_type = #tpu.core_type<tc>, window_params = [{}, {pipeline_mode = #tpu.pipeline_mode<synchronous>, transform_indices = @transform_1, window_bounds = array<i64: 32, 128>}, {transform_indices = @transform_2, window_bounds = array<i64: 32, 128>}, {transform_indices = @transform_3, window_bounds = array<i64: 32, 128>}]} {
    %c32_i32 = arith.constant 32 : i32
    %0 = arith.muli %arg0, %c32_i32 : i32
    %c0_i32 = arith.constant 0 : i32
    %c32_i32_0 = arith.constant 32 : i32
    %1 = arith.addi %c0_i32, %c32_i32_0 : i32
    %c1_i32 = arith.constant 1 : i32
    scf.for %arg8 = %c0_i32 to %1 step %c1_i32  : i32 {
      %11 = arith.addi %0, %arg8 : i32
      %12 = arith.index_cast %11 : i32 to index
      %13 = memref.load %arg1[%12] : memref<64xi32, #tpu.memory_space<smem>>
      %c0_i32_12 = arith.constant 0 : i32
      %c0_i32_13 = arith.constant 0 : i32
      %14 = tpu.memref_slice %arg2[%13, %c0_i32_13] : memref<256x128xf32, #tpu.memory_space<any>> -> memref<1x128xf32, #tpu.memory_space<any>>
      %c0_i32_14 = arith.constant 0 : i32
      %15 = tpu.memref_slice %arg6[%arg8, %c0_i32_14] : memref<32x128xf32, #tpu.memory_space<vmem>> -> memref<1x128xf32, #tpu.memory_space<vmem>>
      %16 = tpu.memref_slice %arg7[%c0_i32_12] : memref<1x!tpu.dma_semaphore, #tpu.memory_space<semaphore_mem>> -> memref<1x!tpu.dma_semaphore, #tpu.memory_space<semaphore_mem>>
      %17 = tpu.memref_squeeze %16 : memref<1x!tpu.dma_semaphore, #tpu.memory_space<semaphore_mem>> -> memref<!tpu.dma_semaphore, #tpu.memory_space<semaphore_mem>>
      tpu.enqueue_dma source(%14 : memref<1x128xf32, #tpu.memory_space<any>>) target(%15 : memref<1x128xf32, #tpu.memory_space<vmem>>) target_semaphore(%17 : memref<!tpu.dma_semaphore, #tpu.memory_space<semaphore_mem>>)
    }
    %c32_i32_1 = arith.constant 32 : i32
    %c0_i32_2 = arith.constant 0 : i32
    %c32_i32_3 = arith.constant 32 : i32
    %2 = arith.addi %c0_i32_2, %c32_i32_3 : i32
    %c1_i32_4 = arith.constant 1 : i32
    scf.for %arg8 = %c0_i32_2 to %2 step %c1_i32_4  : i32 {
      %c0_i32_12 = arith.constant 0 : i32
      %c0_i32_13 = arith.constant 0 : i32
      %c0_i32_14 = arith.constant 0 : i32
      %11 = tpu.memref_slice %arg2[%c0_i32_13, %c0_i32_14] : memref<256x128xf32, #tpu.memory_space<any>> -> memref<1x128xf32, #tpu.memory_space<any>>
      %c0_i32_15 = arith.constant 0 : i32
      %c0_i32_16 = arith.constant 0 : i32
      %12 = tpu.memref_slice %arg6[%c0_i32_15, %c0_i32_16] : memref<32x128xf32, #tpu.memory_space<vmem>> -> memref<1x128xf32, #tpu.memory_space<vmem>>
      %13 = tpu.memref_slice %arg7[%c0_i32_12] : memref<1x!tpu.dma_semaphore, #tpu.memory_space<semaphore_mem>> -> memref<1x!tpu.dma_semaphore, #tpu.memory_space<semaphore_mem>>
      %14 = tpu.memref_squeeze %13 : memref<1x!tpu.dma_semaphore, #tpu.memory_space<semaphore_mem>> -> memref<!tpu.dma_semaphore, #tpu.memory_space<semaphore_mem>>
      tpu.wait_dma2 semaphore(%14 : memref<!tpu.dma_semaphore, #tpu.memory_space<semaphore_mem>>) src(%11 : memref<1x128xf32, #tpu.memory_space<any>>) dst(%12 : memref<1x128xf32, #tpu.memory_space<vmem>>)
    }
    %c0 = arith.constant 0 : index
    %c0_5 = arith.constant 0 : index
    %3 = vector.load %arg6[%c0, %c0_5] : memref<32x128xf32, #tpu.memory_space<vmem>>, vector<32x128xf32>
    %cst = arith.constant 11.3137083 : f32
    %4 = vector.broadcast %cst : f32 to vector<32x128xf32>
    %5 = arith.mulf %3, %4 : vector<32x128xf32>
    %c0_6 = arith.constant 0 : index
    %c0_7 = arith.constant 0 : index
    %6 = vector.load %arg3[%c0_6, %c0_7] : memref<32x128xf32, #tpu.memory_space<vmem>>, vector<32x128xf32>
    %7 = arith.addf %5, %6 : vector<32x128xf32>
    %c0_8 = arith.constant 0 : index
    %c0_9 = arith.constant 0 : index
    %8 = vector.load %arg4[%c0_8, %c0_9] : memref<32x128xf32, #tpu.memory_space<vmem>>, vector<32x128xf32>
    %9 = arith.addf %7, %8 : vector<32x128xf32>
    %c0_10 = arith.constant 0 : index
    %c0_11 = arith.constant 0 : index
    %10 = vector.load %arg5[%c0_10, %c0_11] : memref<32x128xf32, #tpu.memory_space<vmem>>, vector<32x128xf32>
    tpu.vector_store %arg5[%c0_10, %c0_11], %9 {strides = array<i32>} : memref<32x128xf32, #tpu.memory_space<vmem>>, vector<32x128xf32>,
    return
  }
  func.func @transform_1(%arg0: i32, %arg1: memref<64xi32, #tpu.memory_space<smem>>) -> (i32, i32) {
    %c0_i32 = arith.constant 0 : i32
    %c0_i32_0 = arith.constant 0 : i32
    %c0_i32_1 = arith.constant 0 : i32
    return %c0_i32, %c0_i32_0 : i32, i32
  }
  func.func @transform_2(%arg0: i32, %arg1: memref<64xi32, #tpu.memory_space<smem>>) -> (i32, i32) {
    %c0_i32 = arith.constant 0 : i32
    %c0_i32_0 = arith.constant 0 : i32
    return %arg0, %c0_i32 : i32, i32
  }
  func.func @transform_3(%arg0: i32, %arg1: memref<64xi32, #tpu.memory_space<smem>>) -> (i32, i32) {
    %c0_i32 = arith.constant 0 : i32
    %c0_i32_0 = arith.constant 0 : i32
    return %arg0, %c0_i32 : i32, i32
  }
}

</mosaic_0001>

<llo_original>
// kernel: tpu_custom_call.1
$region0: #{tpu_custom_call.1}
  #allocation0 [shape = 'u32[]', space=smem, size = 0x4, offset = 0x4, fixed_abs, tag = 'smem constant byte address 0x4 - core index']
  #allocation1 [shape = 'u32[72,128]{1,0:T(1,128)}', space=vmem, size = 0x9000, scoped, tag = 'internal scratch']
  #allocation2 [shape = 'f32[32,128]{1,0:T(8,128)}', space=vmem, size = 0x4000, scoped, tag = 'scratch operand']
  #allocation3 [shape = 's32[1]{0}', space=sflag, size = 0x4, scoped, tag = 'scratch operand']
  #allocation4 [shape = 's32[1]{0}', space=sflag, size = 0x4, scoped, tag = 'scoped memory for tpu_custom_call.1']
  #allocation5 [shape = 'u8[512]{0}', space=smem, size = 0x200, scoped, tag = 'prefetched SMEM operand 0']
  #allocation12 [shape = 's32[]', space=sflag, size = 0x4, offset = 0, fixed_abs, tag = 'sflag constant byte address 0x0 - dummy sync flag']
  #allocation13 [shape = 's32[]', space=sflag, size = 0x4, offset = 0, fixed_abs, tag = 'sflag constant byte address 0x0 - dummy sync flag']
  #allocation14 [shape = 'u32[]', space=smem, size = 0x4, offset = 0x44, fixed_abs, tag = 'smem constant byte address 0x44 - assertion arg 0']
  #allocation15 [shape = 'u32[]', space=smem, size = 0x4, offset = 0x48, fixed_abs, tag = 'smem constant byte address 0x48 - assertion arg 1']
  %s0 = inlined_call_operand.hbm [shape: s32[64], index: 0, kind: input, shape index: {}]
  %s1 = inlined_call_operand.hbm [shape: f32[256,128], index: 1, kind: input, shape index: {}]
  %s2 = inlined_call_operand.hbm [shape: f32[32,128], index: 2, kind: input, shape index: {}]
  %s3 = inlined_call_operand.hbm [shape: f32[64,128], index: 3, kind: input, shape index: {}]
  %s4 = inlined_call_operand.hbm [shape: f32[64,128], index: 4, kind: output, shape index: {}]
  %s5 = sld [smem:[#allocation0]]
  $region67: #{tpu_custom_call.1} parent=0
    _
  %s7 = ssub.s32 1, %s5
  %s8 = scalar_select 0, %s7, %s5
  %s10 = sshll.u32 %s0, 4
  %s11 = int_to_ptr.hbm [resolvable:$true] %s10
  %13 = dma.hbm_to_smem %s11, 16, [#allocation5], [#allocation4]
  %15 = dma.done [#allocation4], 16
  %16 = sfence
  $region1: #{tpu_custom_call.1} parent=0
    #allocation6 [shape = 'u8[16384]{0}', space=vmem, size = 0x4000, scoped, tag = 'input window, operand 2, single buffered']
    #allocation7 [shape = 's32[2]{0}', space=sflag, size = 0x8, scoped, tag = 'scoped memory for tpu_custom_call.1']
    #allocation8 [shape = 's32[2]{0}', space=sflag, size = 0x8, scoped, tag = 'scoped memory for tpu_custom_call.1']
    #allocation9 [shape = 'u8[32768]{0}', space=vmem, size = 0x8000, scoped, tag = 'input window, operand 3']
    #allocation10 [shape = 's32[2]{0}', space=sflag, size = 0x8, scoped, tag = 'scoped memory for tpu_custom_call.1']
    #allocation11 [shape = 'u8[32768]{0}', space=vmem, size = 0x8000, scoped, tag = 'output window, operand 0']
    %17 = vsyncpa [#allocation7], 0
    %18 = vsyncpa [#allocation10], 0
    %s19 = scalar_lea.sflag [#allocation10], 1
    %20 = vsyncpa %s19, 0
    %21 = vsyncpa [#allocation8], 0
    %s22 = scalar_lea.sflag [#allocation8], 1
    %23 = vsyncpa %s22, 0
    loop: start=0, step=1, limit=4
    $region2: #{tpu_custom_call.1} parent=1 // loop_pre_header
      _
    $region3: #{tpu_custom_call.1} parent=1 // loop_header
      %s25 = sphi 0, %s29
      %p26 = scmp.ge.s32.totalorder %s25, 4
      %s33 = sphi 0, %s33
      %s35 = sphi 0, %s33
      %s36 = sphi 0, %s35
      %s50 = sphi 0, %s36
      %s56 = sphi 0, %s58
      %s59 = sphi 0, %s56
      %s60 = sphi 0, %s59
      %s76 = sphi 0, %s60
      %s82 = sphi 0, %s84
      %s85 = sphi 0, %s82
      %s86 = sphi 0, %s85
      %s102 = sphi 0, %s86
    $region4: #{tpu_custom_call.1} parent=1 // loop_header_branch
      %28 = sbr.rel (%p26) target = $region8
    $region5: #{tpu_custom_call.1} parent=1 // loop_body
      %s30 = ssub.s32 %s25, 1
      %s31 = ssub.s32 %s25, 2
      %s32 = sadd.s32 %s25, 1
      %s34 = sadd.s32 %s33, 1
      %p37 = scmp.eq.s32.totalorder %s25, 1
      %p38 = scmp.ne.s32.totalorder %s33, %s35
      %p39 = scmp.eq.s32.totalorder %s25, 0
      %p40 = por %p38, %p39
      %p41 = scmp.ne.s32.totalorder %s33, %s35
      %p42 = scmp.eq.s32.totalorder %s30, 1
      %p43 = por %p41, %p42
      %p44 = scmp.ne.s32.totalorder %s35, %s36
      %p45 = scmp.eq.s32.totalorder %s30, 0
      %p46 = por %p44, %p45
      %p47 = scmp.ne.s32.totalorder %s35, %s36
      %p48 = scmp.eq.s32.totalorder %s31, 1
      %p49 = por %p47, %p48
      %p51 = scmp.ne.s32.totalorder %s36, %s50
      %p52 = scmp.eq.s32.totalorder %s31, 0
      %p53 = por %p51, %p52
      %s54 = ssub.s32 %s25, %s32
      %p55 = scmp.eq.s32.totalorder %s54, 0
      %s57 = sadd.s32 %s56, 1
      %s58 = scalar_select %p55, %s56, %s57
      %p61 = pneg %p55
      %p62 = scmp.eq.s32.totalorder %s25, 1
      %p63 = por %p61, %p62
      %p64 = scmp.ne.s32.totalorder %s56, %s59
      %p65 = scmp.eq.s32.totalorder %s25, 0
      %p66 = por %p64, %p65
      %p67 = scmp.ne.s32.totalorder %s56, %s59
      %p68 = scmp.eq.s32.totalorder %s30, 1
      %p69 = por %p67, %p68
      %p70 = scmp.ne.s32.totalorder %s59, %s60
      %p71 = scmp.eq.s32.totalorder %s30, 0
      %p72 = por %p70, %p71
      %p73 = scmp.ne.s32.totalorder %s59, %s60
      %p74 = scmp.eq.s32.totalorder %s31, 1
      %p75 = por %p73, %p74
      %p77 = scmp.ne.s32.totalorder %s60, %s76
      %p78 = scmp.eq.s32.totalorder %s31, 0
      %p79 = por %p77, %p78
      %s80 = ssub.s32 %s25, %s32
      %p81 = scmp.eq.s32.totalorder %s80, 0
      %s83 = sadd.s32 %s82, 1
      %s84 = scalar_select %p81, %s82, %s83
      %p87 = pneg %p81
      %p88 = scmp.eq.s32.totalorder %s25, 1
      %p89 = por %p87, %p88
      %p90 = scmp.ne.s32.totalorder %s82, %s85
      %p91 = scmp.eq.s32.totalorder %s25, 0
      %p92 = por %p90, %p91
      %p93 = scmp.ne.s32.totalorder %s82, %s85
      %p94 = scmp.eq.s32.totalorder %s30, 1
      %p95 = por %p93, %p94
      %p96 = scmp.ne.s32.totalorder %s85, %s86
      %p97 = scmp.eq.s32.totalorder %s30, 0
      %p98 = por %p96, %p97
      %p99 = scmp.ne.s32.totalorder %s85, %s86
      %p100 = scmp.eq.s32.totalorder %s31, 1
      %p101 = por %p99, %p100
      %p103 = scmp.ne.s32.totalorder %s86, %s102
      %p104 = scmp.eq.s32.totalorder %s31, 0
      %p105 = por %p103, %p104
      %p106 = scmp.le.s32.totalorder 1, %s25
      %p107 = scmp.lt.s32.totalorder %s25, 3
      %p108 = pnand %p106, %p107
      %p109 = pneg %p108
      // Predicated region
      $region9: #{tpu_custom_call.1} parent=5 // pred_check
        _
      $region10: #{tpu_custom_call.1} parent=5 // pred_check_branch
        %111 = sbr.rel (%p108) target = $region12
      $region11: #{tpu_custom_call.1} parent=5 // pred_region
        %s112 = ssub.s32 %s25, 1
        // Predicated region
        $region13: #{tpu_custom_call.1} parent=11 // pred_check
          %p113 = pneg %p46
        $region14: #{tpu_custom_call.1} parent=11 // pred_check_branch
          %115 = sbr.rel (%p113) target = $region16
        $region15: #{tpu_custom_call.1} parent=11 // pred_region
          %117 = vsyncadd [#allocation7], 0
          %s118 = sshll.u32 %s2, 4
          %s119 = int_to_ptr.hbm [resolvable:$true] %s118
          %s120 = sshll.u32 [#allocation6], 4
          %s121 = int_to_ptr.vmem [resolvable:$true] %s120
          %126 = dma.hbm_to_vmem [thread:$0]  %s119, 512, %s121, [#allocation7], 128, 128, 8
        $region16: #{tpu_custom_call.1} parent=11 // pred_fallthru
          _
      $region12: #{tpu_custom_call.1} parent=5 // pred_fallthru
        _
      %p127 = scmp.lt.s32.totalorder %s25, 2
      // Predicated region
      $region17: #{tpu_custom_call.1} parent=5 // pred_check
        %p128 = pneg %p127
      $region18: #{tpu_custom_call.1} parent=5 // pred_check_branch
        %130 = sbr.rel (%p128) target = $region20
      $region19: #{tpu_custom_call.1} parent=5 // pred_region
        // Predicated region
        $region21: #{tpu_custom_call.1} parent=19 // pred_check
          %p131 = pneg %p66
        $region22: #{tpu_custom_call.1} parent=19 // pred_check_branch
          %133 = sbr.rel (%p131) target = $region24
        $region23: #{tpu_custom_call.1} parent=19 // pred_region
          %s134 = sand.u32 %s56, 1
          %s135 = scalar_lea.sflag [#allocation10], %s134
          %s136 = sand.u32 %s56, 1
          %s137 = smul.addr %s136, 32
          %s138 = scalar_lea.vmem [#allocation9], %s137
          %s139 = smul.u32 4, %s25
          %141 = vsyncadd %s135, 0
          %s142 = smul.addr %s139, 8
          %s143 = scalar_lea.hbm %s3, %s142
          %s144 = sshll.u32 %s143, 4
          %s145 = int_to_ptr.hbm [resolvable:$true] %s144
          %s146 = sshll.u32 %s138, 4
          %s147 = int_to_ptr.vmem [resolvable:$true] %s146
          %152 = dma.hbm_to_vmem [thread:$0]  %s145, 512, %s147, %s135, 128, 128, 8
        $region24: #{tpu_custom_call.1} parent=19 // pred_fallthru
          _
      $region20: #{tpu_custom_call.1} parent=5 // pred_fallthru
        _
      %p153 = scmp.le.s32.totalorder 1, %s25
      %p154 = scmp.lt.s32.totalorder %s25, 3
      %p155 = pnand %p153, %p154
      %p156 = pneg %p155
      // Predicated region
      $region25: #{tpu_custom_call.1} parent=5 // pred_check
        _
      $region26: #{tpu_custom_call.1} parent=5 // pred_check_branch
        %158 = sbr.rel (%p155) target = $region28
      $region27: #{tpu_custom_call.1} parent=5 // pred_region
        %s159 = ssub.s32 %s25, 1
        // Predicated region
        $region29: #{tpu_custom_call.1} parent=27 // pred_check
          %p160 = pneg %p46
        $region30: #{tpu_custom_call.1} parent=27 // pred_check_branch
          %162 = sbr.rel (%p160) target = $region32
        $region31: #{tpu_custom_call.1} parent=27 // pred_region
          %164 = dma.done [#allocation7], 512
        $region32: #{tpu_custom_call.1} parent=27 // pred_fallthru
          _
        %s165 = sand.u32 %s59, 1
        %s166 = scalar_lea.sflag [#allocation10], %s165
        %s167 = sand.u32 %s59, 1
        %s168 = smul.addr %s167, 32
        %s169 = scalar_lea.vmem [#allocation9], %s168
        // Predicated region
        $region33: #{tpu_custom_call.1} parent=27 // pred_check
          %p170 = pneg %p72
        $region34: #{tpu_custom_call.1} parent=27 // pred_check_branch
          %172 = sbr.rel (%p170) target = $region36
        $region35: #{tpu_custom_call.1} parent=27 // pred_region
          %174 = dma.done %s166, 512
        $region36: #{tpu_custom_call.1} parent=27 // pred_fallthru
          _
        %p175 = pneg %p46
        %p176 = pneg %p43
        %s177 = sand.u32 %s59, 1
        %s178 = scalar_lea.sflag [#allocation10], %s177
        %s179 = sand.u32 %s59, 1
        %s180 = smul.addr %s179, 32
        %s181 = scalar_lea.vmem [#allocation9], %s180
        %p182 = pneg %p72
        %p183 = pneg %p69
        %p184 = pneg %p98
        %p185 = pneg %p95
        %s186 = sand.u32 %s85, 1
        %s187 = scalar_lea.sflag [#allocation8], %s186
        %s188 = sand.u32 %s85, 1
        %s189 = smul.addr %s188, 32
        %s190 = scalar_lea.vmem [#allocation11], %s189
        %s191 = smul.u32 4, %s30
        %s192 = smul.u32 4, %s30
        %s193 = smul.u32 %s30, 32
        loop: start=0, step=1, limit=32
        $region37: #{tpu_custom_call.1} parent=27 // loop_pre_header
          _
        $region38: #{tpu_custom_call.1} parent=27 // loop_header
          %s195 = sphi 0, %s199
          %p196 = scmp.ge.s32.totalorder %s195, 32
        $region39: #{tpu_custom_call.1} parent=27 // loop_header_branch
          %198 = sbr.rel (%p196) target = $region43
        $region40: #{tpu_custom_call.1} parent=27 // loop_body
          %s200 = sadd.s32 %s193, %s195
          %s201 = sld [smem:[#allocation5 + %s200]]
          %s202 = scalar_lea.hbm %s1, %s201
          %s203 = scalar_lea.vmem [#allocation2], %s195
          // Predicated region
          $region44: #{tpu_custom_call.1} parent=40 // pred_check
            _
          $region45: #{tpu_custom_call.1} parent=40 // pred_check_branch
            %205 = sbr.rel target = $region47
          $region46: #{tpu_custom_call.1} parent=40 // pred_region
            %206 = sst [smem:[#allocation14]] [#allocation13]
            %207 = sst [smem:[#allocation15]] [#allocation12]
          $region47: #{tpu_custom_call.1} parent=40 // pred_fallthru
            _
          %209 = shalt.err (0)
          %s211 = sshll.u32 %s202, 4
          %s212 = int_to_ptr.hbm [resolvable:$true] %s211
          %s213 = sshll.u32 %s203, 4
          %s214 = int_to_ptr.vmem [resolvable:$true] %s213
          %216 = dma.hbm_to_vmem [thread:$0]  %s212, 16, %s214, [#allocation3]
        $region41: #{tpu_custom_call.1} parent=27 // loop_footer
          %s199 = sadd.s32 1, %s195
        $region42: #{tpu_custom_call.1} parent=27 // loop_footer_branch
          %194 = sbr.rel target = $region38
        $region43: #{tpu_custom_call.1} parent=27 // loop_exit
          _
        loop: start=0, step=1, limit=32
        $region48: #{tpu_custom_call.1} parent=27 // loop_pre_header
          _
        $region49: #{tpu_custom_call.1} parent=27 // loop_header
          %s218 = sphi 0, %s222
          %p219 = scmp.ge.s32.totalorder %s218, 32
        $region50: #{tpu_custom_call.1} parent=27 // loop_header_branch
          %221 = sbr.rel (%p219) target = $region54
        $region51: #{tpu_custom_call.1} parent=27 // loop_body
          %s223 = smul.u32 1, 1
          %s224 = sshll.u32 %s223, 4
          %225 = dma.done [#allocation3], %s224
        $region52: #{tpu_custom_call.1} parent=27 // loop_footer
          %s222 = sadd.s32 1, %s218
        $region53: #{tpu_custom_call.1} parent=27 // loop_footer_branch
          %217 = sbr.rel target = $region49
        $region54: #{tpu_custom_call.1} parent=27 // loop_exit
          _
        %v226 = vld [vmem:[#allocation2] sm:$0xff]
        %v227 = vld [vmem:[#allocation2 + $0x8] sm:$0xff]
        %v228 = vld [vmem:[#allocation2 + $0x10] sm:$0xff]
        %v229 = vld [vmem:[#allocation2 + $0x18] sm:$0xff]
        %v230 = vmul.f32 %v226, 11.313708
        %v231 = vmul.f32 %v227, 11.313708
        %v232 = vmul.f32 %v228, 11.313708
        %v233 = vmul.f32 %v229, 11.313708
        %v234 = vld [vmem:[#allocation6] sm:$0xff]
        %v235 = vld [vmem:[#allocation6 + $0x8] sm:$0xff]
        %v236 = vld [vmem:[#allocation6 + $0x10] sm:$0xff]
        %v237 = vld [vmem:[#allocation6 + $0x18] sm:$0xff]
        %v238 = vadd.f32 %v230, %v234
        %v239 = vadd.f32 %v231, %v235
        %v240 = vadd.f32 %v232, %v236
        %v241 = vadd.f32 %v233, %v237
        %v242 = vld [vmem:[%s169] sm:$0xff]
        %v243 = vld [vmem:[%s169 + $0x8] sm:$0xff]
        %v244 = vld [vmem:[%s169 + $0x10] sm:$0xff]
        %v245 = vld [vmem:[%s169 + $0x18] sm:$0xff]
        %v246 = vadd.f32 %v238, %v242
        %v247 = vadd.f32 %v239, %v243
        %v248 = vadd.f32 %v240, %v244
        %v249 = vadd.f32 %v241, %v245
        %250 = vst [vmem:[%s190] sm:$0xff] %v246
        %251 = vst [vmem:[%s190 + $0x8] sm:$0xff] %v247
        %252 = vst [vmem:[%s190 + $0x10] sm:$0xff] %v248
        %253 = vst [vmem:[%s190 + $0x18] sm:$0xff] %v249
        %s254 = sand.u32 %s85, 1
        %s255 = scalar_lea.sflag [#allocation8], %s254
        %s256 = sand.u32 %s85, 1
        %s257 = smul.addr %s256, 32
        %s258 = scalar_lea.vmem [#allocation11], %s257
        // Predicated region
        $region55: #{tpu_custom_call.1} parent=27 // pred_check
          %p259 = pneg %p95
        $region56: #{tpu_custom_call.1} parent=27 // pred_check_branch
          %261 = sbr.rel (%p259) target = $region58
        $region57: #{tpu_custom_call.1} parent=27 // pred_region
          %s262 = smul.u32 4, %s30
          %264 = vsyncadd %s255, 0
          %s265 = smul.addr %s262, 8
          %s266 = scalar_lea.hbm %s4, %s265
          %s267 = sshll.u32 %s258, 4
          %s268 = int_to_ptr.vmem [resolvable:$true] %s267
          %s269 = sshll.u32 %s266, 4
          %s270 = int_to_ptr.hbm [resolvable:$true] %s269
          %275 = dma.vmem_to_hbm [thread:$0]  %s268, 512, %s270, %s255, 128, 128, 8
        $region58: #{tpu_custom_call.1} parent=27 // pred_fallthru
          _
      $region28: #{tpu_custom_call.1} parent=5 // pred_fallthru
        _
      %p276 = scmp.le.s32.totalorder 2, %s25
      // Predicated region
      $region59: #{tpu_custom_call.1} parent=5 // pred_check
        %p277 = pneg %p276
      $region60: #{tpu_custom_call.1} parent=5 // pred_check_branch
        %279 = sbr.rel (%p277) target = $region62
      $region61: #{tpu_custom_call.1} parent=5 // pred_region
        %s280 = ssub.s32 %s25, 2
        // Predicated region
        $region63: #{tpu_custom_call.1} parent=61 // pred_check
          %p281 = pneg %p101
        $region64: #{tpu_custom_call.1} parent=61 // pred_check_branch
          %283 = sbr.rel (%p281) target = $region66
        $region65: #{tpu_custom_call.1} parent=61 // pred_region
          %s284 = sand.u32 %s86, 1
          %s285 = scalar_lea.sflag [#allocation8], %s284
          %s286 = sand.u32 %s86, 1
          %s287 = smul.addr %s286, 32
          %s288 = scalar_lea.vmem [#allocation11], %s287
          %290 = dma.done %s285, 512
        $region66: #{tpu_custom_call.1} parent=61 // pred_fallthru
          _
      $region62: #{tpu_custom_call.1} parent=5 // pred_fallthru
        _
    $region6: #{tpu_custom_call.1} parent=1 // loop_footer
      %s29 = sadd.s32 1, %s25
    $region7: #{tpu_custom_call.1} parent=1 // loop_footer_branch
      %24 = sbr.rel target = $region3
    $region8: #{tpu_custom_call.1} parent=1 // loop_exit
      _
    %291 = vsyncpa [#allocation7], 1
    %s292 = scalar_lea.sflag [#allocation7], 1
    %293 = vsyncpa %s292, 1
    %294 = vsyncpa [#allocation10], 1
    %s295 = scalar_lea.sflag [#allocation10], 1
    %296 = vsyncpa %s295, 1
    %297 = vsyncpa [#allocation8], 1
    %s298 = scalar_lea.sflag [#allocation8], 1
    %299 = vsyncpa %s298, 1
  %300 = vsyncmov [#allocation3]
  %s301 = vpop.sfrf %300
  %p302 = scmp.eq.s32.totalorder %s301, 0
  %p303 = pneg %p302
  %305 = shalt.err (%p303)

</llo_original>
